<compile_context>
chip_gen: v5e
topology: v5e:2x2
jax: 0.10.0
libtpu: 0.0.40
codegen_flags: <defaults>
</compile_context>

<pallas_src>
import functools

import jax
import jax.numpy as jnp
from jax import lax
from jax.experimental import pallas as pl
from jax.experimental.pallas import tpu as pltpu

_NW = 128   # MXU N (padded classifier output rows)
_NL = 8     # logits HBM lane width (full-dim block -> single masked vreg store)


def _round_up(x, m):
    return (x + m - 1) // m * m


def _combined_kernel(bert_ref, code_ref, w1_ref, w2_ref, b_ref,
                     logits_ref, comb_ref, *, h1p):
    """One batch tile: concat writeback + logits straight off the input blocks."""
    # combined = torch.cat((outputs_bert, outputs_codebert), dim=1)
    # (split point h1p is a 128-multiple -> both halves are full-width stores)
    comb_ref[:, :h1p] = bert_ref[...]
    comb_ref[:, h1p:] = code_ref[...]

    # logits = combined @ W.T + b, computed directly from the input blocks so
    # the MXU push neither waits on nor reloads the comb_ref writeback.
    # Operands stay in their native dtype (bf16 ok); accumulate in f32.
    acc = lax.dot_general(bert_ref[...], w1_ref[...],
                          dimension_numbers=(((1,), (1,)), ((), ())),
                          preferred_element_type=jnp.float32)
    acc = acc + lax.dot_general(code_ref[...], w2_ref[...],
                                dimension_numbers=(((1,), (1,)), ((), ())),
                                preferred_element_type=jnp.float32)
    nout = logits_ref.shape[-1]
    logits_ref[...] = (acc[:, :nout] + b_ref[...]).astype(logits_ref.dtype)


def combined_model_forward(outputs_bert, outputs_codebert, clf_weight, clf_bias,
                           *, vmem_block_budget_bytes=20 * 1024 * 1024):
    """Pallas implementation of CombinedModel.forward.

    Args:
      outputs_bert:      (B, H1) — output of base_model1
      outputs_codebert:  (B, H2) — output of base_model2
      clf_weight:        (2, H1 + H2) — nn.Linear weight (PyTorch layout)
      clf_bias:          (2,) — nn.Linear bias
    Returns:
      (logits (B, 2) f32, combined (B, H1 + H2) in the encoders' dtype)
    """
    B, H1 = outputs_bert.shape
    B2, H2 = outputs_codebert.shape
    assert B == B2, "batch mismatch between the two base-model outputs"
    NOUT = clf_weight.shape[0]                      # 2 classes
    assert NOUT <= _NL <= _NW

    # Keep the encoders' native dtype (bf16 in practice) through the concat
    # and the `combined` output; no wrapper-side f32 upcast.
    comb_dtype = jnp.promote_types(outputs_bert.dtype, outputs_codebert.dtype)
    bert = outputs_bert.astype(comb_dtype)          # no-op in the common case
    code = outputs_codebert.astype(comb_dtype)

    # Real BERT/CodeBERT hiddens (768, 1024, ...) are 128-multiples: fast path,
    # no padding at all.  Non-aligned hiddens take a slow path that pads the
    # hidden columns only and reassembles `combined` afterwards.
    H1p = _round_up(H1, 128)
    H2p = _round_up(H2, 128)
    aligned = (H1p == H1) and (H2p == H2)
    if not aligned:
        # TODO(synk): slow path for non-128-aligned hidden sizes (odd config).
        bert = jnp.pad(bert, ((0, 0), (0, H1p - H1)))
        code = jnp.pad(code, ((0, 0), (0, H2p - H2)))
    HCp = H1p + H2p

    # Weight kept in native (out, in) layout, split at the concat point, cast
    # to the MXU operand dtype, zero-padded to _NW output rows.
    w = clf_weight.astype(comb_dtype)
    w1 = jnp.pad(w[:, :H1], ((0, _NW - NOUT), (0, H1p - H1)))     # (_NW, H1p)
    w2 = jnp.pad(w[:, H1:], ((0, _NW - NOUT), (0, H2p - H2)))     # (_NW, H2p)
    b_pad = jnp.pad(clf_bias.astype(jnp.float32).reshape(1, NOUT),
                    ((0, 0), (0, _NL - NOUT)))                    # (1, _NL) f32

    # ---- batch tile sizing -------------------------------------------------
    in_item = jnp.dtype(comb_dtype).itemsize
    per_row_bytes = in_item * (H1p + H2p + HCp) + 4 * _NL
    tile_b = 1024
    while tile_b > 8 and 2 * tile_b * per_row_bytes > vmem_block_budget_bytes:
        tile_b //= 2
    if B >= 16:
        # guarantee >= 2 grid steps so the "parallel" batch axis can be split
        # across v7x's 2 TensorCores.
        tile_b = min(tile_b, max(8, _round_up(pl.cdiv(B, 2), 8)))
    if tile_b >= B:
        tile_b = B          # single full-extent block (any B legal as full dim)
    grid = (pl.cdiv(B, tile_b),)

    # ---- VMEM ask: actual double-buffered footprint + headroom --------------
    weight_bytes = in_item * _NW * (H1p + H2p) + 4 * _NL
    footprint = 2 * (tile_b * per_row_bytes + weight_bytes)
    vmem_limit = int(min(max(footprint + (footprint >> 1) + (2 << 20), 8 << 20),
                         32 << 20))

    cost = pl.CostEstimate(
        flops=2 * B * (H1p + H2p) * _NW,
        transcendentals=0,
        bytes_accessed=(in_item * B * (H1p + H2p)      # inputs
                        + in_item * B * HCp            # combined writeback
                        + 4 * B * _NL                  # logits
                        + weight_bytes),               # resident weight + bias
    )

    kernel = functools.partial(_combined_kernel, h1p=H1p)

    logits_pad, comb_pad = pl.pallas_call(
        kernel,
        grid=grid,
        in_specs=[
            pl.BlockSpec((tile_b, H1p), lambda i: (i, 0)),
            pl.BlockSpec((tile_b, H2p), lambda i: (i, 0)),
            pl.BlockSpec((_NW, H1p), lambda i: (0, 0)),    # W (bert half), resident
            pl.BlockSpec((_NW, H2p), lambda i: (0, 0)),    # W (code half), resident
            pl.BlockSpec((1, _NL), lambda i: (0, 0)),      # bias, resident
        ],
        out_specs=(
            pl.BlockSpec((tile_b, _NL), lambda i: (i, 0)),
            pl.BlockSpec((tile_b, HCp), lambda i: (i, 0)),
        ),
        out_shape=(
            jax.ShapeDtypeStruct((B, _NL), jnp.float32),
            jax.ShapeDtypeStruct((B, HCp), comb_dtype),
        ),
        compiler_params=pltpu.CompilerParams(
            dimension_semantics=("parallel",),
            vmem_limit_bytes=vmem_limit,
        ),
        cost_estimate=cost,
    )(bert, code, w1, w2, b_pad)

    logits = logits_pad[:, :NOUT]
    if aligned:
        combined = comb_pad
    else:
        combined = jnp.concatenate(
            [comb_pad[:, :H1], comb_pad[:, H1p:H1p + H2]], axis=1)
    return logits, combined


def _reference_forward(outputs_bert, outputs_codebert, clf_weight, clf_bias):
    combined = jnp.concatenate([outputs_bert, outputs_codebert], axis=1)
    logits = (combined.astype(jnp.float32) @ clf_weight.astype(jnp.float32).T
              + clf_bias.astype(jnp.float32))
    return logits, combined


def _run_case(key, B, H1, H2, dtype, atol):
    k1, k2, k3, k4 = jax.random.split(key, 4)
    outputs_bert = jax.random.normal(k1, (B, H1), dtype=jnp.float32).astype(dtype)
    outputs_codebert = jax.random.normal(k2, (B, H2), dtype=jnp.float32).astype(dtype)
    clf_weight = jax.random.normal(k3, (2, H1 + H2), dtype=jnp.float32) * 0.02
    clf_bias = jax.random.normal(k4, (2,), dtype=jnp.float32) * 0.02

    logits, combined = jax.block_until_ready(
        combined_model_forward(outputs_bert, outputs_codebert,
                               clf_weight, clf_bias))
    ref_logits, ref_combined = _reference_forward(
        outputs_bert, outputs_codebert, clf_weight, clf_bias)

    assert logits.shape == (B, 2)
    assert combined.shape == (B, H1 + H2) and combined.dtype == dtype
    assert jnp.allclose(logits, ref_logits, atol=atol, rtol=1e-2)
    assert jnp.array_equal(combined, ref_combined)


if __name__ == "__main__":
    key = jax.random.PRNGKey(0)
    k_a, k_b, k_c = jax.random.split(key, 3)

    # Fast path: lane-aligned hiddens, single batch tile, f32.
    _run_case(k_a, B=8, H1=128, H2=128, dtype=jnp.float32, atol=1e-4)
    # bf16 end-to-end, ragged batch handled by the cdiv grid (no wrapper pad),
    # >= 2 batch tiles so the parallel axis can use both v7x TensorCores.
    _run_case(k_b, B=20, H1=128, H2=128, dtype=jnp.bfloat16, atol=2e-2)
    # Slow path: non-128-aligned hiddens (pads hidden columns only).
    _run_case(k_c, B=10, H1=96, H2=160, dtype=jnp.float32, atol=1e-4)

    print("KERNEL_OK")
</pallas_src>

<mosaic_0001>
module attributes {stable_mosaic.version = 11 : i64} {
  func.func @_combined_kernel(%arg0: i32, %arg1: memref<8x128xf32, #tpu.memory_space<vmem>>, %arg2: memref<8x128xf32, #tpu.memory_space<vmem>>, %arg3: memref<128x128xf32, #tpu.memory_space<vmem>>, %arg4: memref<128x128xf32, #tpu.memory_space<vmem>>, %arg5: memref<1x8xf32, #tpu.memory_space<vmem>>, %arg6: memref<8x8xf32, #tpu.memory_space<vmem>>, %arg7: memref<8x256xf32, #tpu.memory_space<vmem>>) attributes {dimension_semantics = [#tpu.dimension_semantics<parallel>], iteration_bounds = array<i64: 1>, scalar_prefetch = 0 : i64, scratch_operands = 0 : i64, tpu.core_type = #tpu.core_type<tc>, window_params = [{transform_indices = @transform_0, window_bounds = array<i64: 8, 128>}, {transform_indices = @transform_1, window_bounds = array<i64: 8, 128>}, {pipeline_mode = #tpu.pipeline_mode<synchronous>, transform_indices = @transform_2, window_bounds = array<i64: 128, 128>}, {pipeline_mode = #tpu.pipeline_mode<synchronous>, transform_indices = @transform_3, window_bounds = array<i64: 128, 128>}, {pipeline_mode = #tpu.pipeline_mode<synchronous>, transform_indices = @transform_4, window_bounds = array<i64: 1, 8>}, {transform_indices = @transform_5, window_bounds = array<i64: 8, 8>}, {transform_indices = @transform_6, window_bounds = array<i64: 8, 256>}]} {
    %c0 = arith.constant 0 : index
    %c0_0 = arith.constant 0 : index
    %0 = vector.load %arg1[%c0, %c0_0] : memref<8x128xf32, #tpu.memory_space<vmem>>, vector<8x128xf32>
    %c0_1 = arith.constant 0 : index
    %c0_2 = arith.constant 0 : index
    %1 = vector.load %arg7[%c0_1, %c0_2] : memref<8x256xf32, #tpu.memory_space<vmem>>, vector<8x128xf32>
    tpu.vector_store %arg7[%c0_1, %c0_2], %0 {strides = array<i32>} : memref<8x256xf32, #tpu.memory_space<vmem>>, vector<8x128xf32>,
    %c0_3 = arith.constant 0 : index
    %c0_4 = arith.constant 0 : index
    %2 = vector.load %arg2[%c0_3, %c0_4] : memref<8x128xf32, #tpu.memory_space<vmem>>, vector<8x128xf32>
    %c0_5 = arith.constant 0 : index
    %c128 = arith.constant 128 : index
    %3 = vector.load %arg7[%c0_5, %c128] : memref<8x256xf32, #tpu.memory_space<vmem>>, vector<8x128xf32>
    tpu.vector_store %arg7[%c0_5, %c128], %2 {strides = array<i32>} : memref<8x256xf32, #tpu.memory_space<vmem>>, vector<8x128xf32>,
    %c0_6 = arith.constant 0 : index
    %c0_7 = arith.constant 0 : index
    %4 = vector.load %arg1[%c0_6, %c0_7] : memref<8x128xf32, #tpu.memory_space<vmem>>, vector<8x128xf32>
    %c0_8 = arith.constant 0 : index
    %c0_9 = arith.constant 0 : index
    %5 = vector.load %arg3[%c0_8, %c0_9] : memref<128x128xf32, #tpu.memory_space<vmem>>, vector<128x128xf32>
    %cst = arith.constant dense<0.000000e+00> : vector<8x128xf32>
    %6 = tpu.matmul %4, %5, %cst {dimension_numbers = #tpu.dot_dimension_numbers<[1], [1], [0], [0], [0, 0, 1, 0], [], []>} : vector<8x128xf32>, vector<128x128xf32>, vector<8x128xf32> -> vector<8x128xf32>
    %c0_10 = arith.constant 0 : index
    %c0_11 = arith.constant 0 : index
    %7 = vector.load %arg2[%c0_10, %c0_11] : memref<8x128xf32, #tpu.memory_space<vmem>>, vector<8x128xf32>
    %c0_12 = arith.constant 0 : index
    %c0_13 = arith.constant 0 : index
    %8 = vector.load %arg4[%c0_12, %c0_13] : memref<128x128xf32, #tpu.memory_space<vmem>>, vector<128x128xf32>
    %cst_14 = arith.constant dense<0.000000e+00> : vector<8x128xf32>
    %9 = tpu.matmul %7, %8, %cst_14 {dimension_numbers = #tpu.dot_dimension_numbers<[1], [1], [0], [0], [0, 0, 1, 0], [], []>} : vector<8x128xf32>, vector<128x128xf32>, vector<8x128xf32> -> vector<8x128xf32>
    %10 = arith.addf %6, %9 : vector<8x128xf32>
    %11 = vector.extract_strided_slice %10 {offsets = [0, 0], sizes = [8, 8], strides = [1, 1]} : vector<8x128xf32> to vector<8x8xf32>
    %c0_15 = arith.constant 0 : index
    %c0_16 = arith.constant 0 : index
    %12 = vector.load %arg5[%c0_15, %c0_16] : memref<1x8xf32, #tpu.memory_space<vmem>>, vector<1x8xf32>
    %13 = vector.broadcast %12 : vector<1x8xf32> to vector<8x8xf32>
    %14 = arith.addf %11, %13 : vector<8x8xf32>
    %c0_17 = arith.constant 0 : index
    %c0_18 = arith.constant 0 : index
    %15 = vector.load %arg6[%c0_17, %c0_18] : memref<8x8xf32, #tpu.memory_space<vmem>>, vector<8x8xf32>
    tpu.vector_store %arg6[%c0_17, %c0_18], %14 {strides = array<i32>} : memref<8x8xf32, #tpu.memory_space<vmem>>, vector<8x8xf32>,
    return
  }
  func.func @transform_0(%arg0: i32) -> (i32, i32) {
    %c0_i32 = arith.constant 0 : i32
    %c0_i32_0 = arith.constant 0 : i32
    return %arg0, %c0_i32 : i32, i32
  }
  func.func @transform_1(%arg0: i32) -> (i32, i32) {
    %c0_i32 = arith.constant 0 : i32
    %c0_i32_0 = arith.constant 0 : i32
    return %arg0, %c0_i32 : i32, i32
  }
  func.func @transform_2(%arg0: i32) -> (i32, i32) {
    %c0_i32 = arith.constant 0 : i32
    %c0_i32_0 = arith.constant 0 : i32
    %c0_i32_1 = arith.constant 0 : i32
    return %c0_i32, %c0_i32_0 : i32, i32
  }
  func.func @transform_3(%arg0: i32) -> (i32, i32) {
    %c0_i32 = arith.constant 0 : i32
    %c0_i32_0 = arith.constant 0 : i32
    %c0_i32_1 = arith.constant 0 : i32
    return %c0_i32, %c0_i32_0 : i32, i32
  }
  func.func @transform_4(%arg0: i32) -> (i32, i32) {
    %c0_i32 = arith.constant 0 : i32
    %c0_i32_0 = arith.constant 0 : i32
    %c0_i32_1 = arith.constant 0 : i32
    return %c0_i32, %c0_i32_0 : i32, i32
  }
  func.func @transform_5(%arg0: i32) -> (i32, i32) {
    %c0_i32 = arith.constant 0 : i32
    %c0_i32_0 = arith.constant 0 : i32
    return %arg0, %c0_i32 : i32, i32
  }
  func.func @transform_6(%arg0: i32) -> (i32, i32) {
    %c0_i32 = arith.constant 0 : i32
    %c0_i32_0 = arith.constant 0 : i32
    return %arg0, %c0_i32 : i32, i32
  }
}

</mosaic_0001>

<llo_original>
// kernel: tpu_custom_call.1
$region0: #{tpu_custom_call.1}
  #allocation0 [shape = 'u32[]', space=smem, size = 0x4, offset = 0x4, fixed_abs, tag = 'smem constant byte address 0x4 - core index']
  #allocation1 [shape = 'u32[72,128]{1,0:T(1,128)}', space=vmem, size = 0x9000, scoped, tag = 'internal scratch']
  %s0 = inlined_call_operand.hbm [shape: f32[8,128], index: 0, kind: input, shape index: {}]
  %s1 = inlined_call_operand.hbm [shape: f32[8,128], index: 1, kind: input, shape index: {}]
  %s2 = inlined_call_operand.hbm [shape: f32[128,128], index: 2, kind: input, shape index: {}]
  %s3 = inlined_call_operand.hbm [shape: f32[128,128], index: 3, kind: input, shape index: {}]
  %s4 = inlined_call_operand.vmem [shape: f32[1,8], index: 4, kind: input, shape index: {}]
  %s5 = inlined_call_operand.hbm [shape: f32[8,8], index: 5, kind: output, shape index: {0}]
  %s6 = inlined_call_operand.hbm [shape: f32[8,256], index: 6, kind: output, shape index: {1}]
  %7 = xla_tuple %s5, %s6
  %s8 = sld [smem:[#allocation0]]
  $region54: #{tpu_custom_call.1} parent=0
    _
  %s10 = ssub.s32 1, %s8
  %s11 = scalar_select 0, %s10, %s8
  $region1: #{tpu_custom_call.1} parent=0
    #allocation2 [shape = 'u8[4096]{0}', space=vmem, size = 0x1000, scoped, tag = 'input window, operand 0, single buffered']
    #allocation3 [shape = 's32[1]{0}', space=sflag, size = 0x4, scoped, tag = 'scoped memory for tpu_custom_call.1']
    #allocation4 [shape = 's32[1]{0}', space=sflag, size = 0x4, scoped, tag = 'scoped memory for tpu_custom_call.1']
    #allocation5 [shape = 'u8[4096]{0}', space=vmem, size = 0x1000, scoped, tag = 'input window, operand 1, single buffered']
    #allocation6 [shape = 's32[1]{0}', space=sflag, size = 0x4, scoped, tag = 'scoped memory for tpu_custom_call.1']
    #allocation7 [shape = 'u8[65536]{0}', space=vmem, size = 0x10000, scoped, tag = 'input window, operand 2, single buffered']
    #allocation8 [shape = 'u8[65536]{0}', space=vmem, size = 0x10000, scoped, tag = 'input window, operand 3, single buffered']
    #allocation9 [shape = 's32[1]{0}', space=sflag, size = 0x4, scoped, tag = 'scoped memory for tpu_custom_call.1']
    #allocation10 [shape = 'u8[4096]{0}', space=vmem, size = 0x1000, scoped, tag = 'output window, operand 0, single buffered']
    #allocation11 [shape = 'u8[8192]{0}', space=vmem, size = 0x2000, scoped, tag = 'output window, operand 1, single buffered']
    #allocation12 [shape = 's32[1]{0}', space=sflag, size = 0x4, scoped, tag = 'scoped memory for tpu_custom_call.1']
    %12 = vsyncpa [#allocation3], 0
    %13 = vsyncpa [#allocation6], 0
    %14 = vsyncpa [#allocation9], 0
    %15 = vsyncpa [#allocation4], 0
    %16 = vsyncpa [#allocation12], 0
    // Predicated region
    $region2: #{tpu_custom_call.1} parent=1 // pred_check
      _
    $region3: #{tpu_custom_call.1} parent=1 // pred_check_branch
      %18 = sbr.rel (0) target = $region5
    $region4: #{tpu_custom_call.1} parent=1 // pred_region
      %20 = vsyncadd [#allocation3], 0
      %s22 = sshll.u32 %s0, 4
      %s23 = int_to_ptr.hbm [resolvable:$true] %s22
      %s24 = sshll.u32 [#allocation2], 4
      %s25 = int_to_ptr.vmem [resolvable:$true] %s24
      %27 = dma.hbm_to_vmem [thread:$0]  %s23, 128, %s25, [#allocation3]
    $region5: #{tpu_custom_call.1} parent=1 // pred_fallthru
      _
    // Predicated region
    $region6: #{tpu_custom_call.1} parent=1 // pred_check
      _
    $region7: #{tpu_custom_call.1} parent=1 // pred_check_branch
      %29 = sbr.rel (0) target = $region9
    $region8: #{tpu_custom_call.1} parent=1 // pred_region
      %31 = vsyncadd [#allocation6], 0
      %s33 = sshll.u32 %s1, 4
      %s34 = int_to_ptr.hbm [resolvable:$true] %s33
      %s35 = sshll.u32 [#allocation5], 4
      %s36 = int_to_ptr.vmem [resolvable:$true] %s35
      %38 = dma.hbm_to_vmem [thread:$0]  %s34, 128, %s36, [#allocation6]
    $region9: #{tpu_custom_call.1} parent=1 // pred_fallthru
      _
    // Predicated region
    $region10: #{tpu_custom_call.1} parent=1 // pred_check
      _
    $region11: #{tpu_custom_call.1} parent=1 // pred_check_branch
      %40 = sbr.rel (0) target = $region13
    $region12: #{tpu_custom_call.1} parent=1 // pred_region
      %42 = vsyncadd [#allocation6], 0
      %s43 = sshll.u32 %s2, 4
      %s44 = int_to_ptr.hbm [resolvable:$true] %s43
      %s45 = sshll.u32 [#allocation7], 4
      %s46 = int_to_ptr.vmem [resolvable:$true] %s45
      %51 = dma.hbm_to_vmem [thread:$0]  %s44, 2048, %s46, [#allocation6], 128, 128, 8
    $region13: #{tpu_custom_call.1} parent=1 // pred_fallthru
      _
    // Predicated region
    $region14: #{tpu_custom_call.1} parent=1 // pred_check
      _
    $region15: #{tpu_custom_call.1} parent=1 // pred_check_branch
      %53 = sbr.rel (0) target = $region17
    $region16: #{tpu_custom_call.1} parent=1 // pred_region
      %55 = vsyncadd [#allocation9], 0
      %s56 = sshll.u32 %s3, 4
      %s57 = int_to_ptr.hbm [resolvable:$true] %s56
      %s58 = sshll.u32 [#allocation8], 4
      %s59 = int_to_ptr.vmem [resolvable:$true] %s58
      %64 = dma.hbm_to_vmem [thread:$0]  %s57, 2048, %s59, [#allocation9], 128, 128, 8
    $region17: #{tpu_custom_call.1} parent=1 // pred_fallthru
      _
    // Predicated region
    $region18: #{tpu_custom_call.1} parent=1 // pred_check
      _
    $region19: #{tpu_custom_call.1} parent=1 // pred_check_branch
      %66 = sbr.rel (0) target = $region21
    $region20: #{tpu_custom_call.1} parent=1 // pred_region
      _
    $region21: #{tpu_custom_call.1} parent=1 // pred_fallthru
      _
    // Predicated region
    $region22: #{tpu_custom_call.1} parent=1 // pred_check
      _
    $region23: #{tpu_custom_call.1} parent=1 // pred_check_branch
      %68 = sbr.rel (0) target = $region25
    $region24: #{tpu_custom_call.1} parent=1 // pred_region
      %70 = dma.done [#allocation3], 128
    $region25: #{tpu_custom_call.1} parent=1 // pred_fallthru
      _
    // Predicated region
    $region26: #{tpu_custom_call.1} parent=1 // pred_check
      _
    $region27: #{tpu_custom_call.1} parent=1 // pred_check_branch
      %72 = sbr.rel (0) target = $region29
    $region28: #{tpu_custom_call.1} parent=1 // pred_region
      %74 = dma.done [#allocation6], 128
    $region29: #{tpu_custom_call.1} parent=1 // pred_fallthru
      _
    // Predicated region
    $region30: #{tpu_custom_call.1} parent=1 // pred_check
      _
    $region31: #{tpu_custom_call.1} parent=1 // pred_check_branch
      %76 = sbr.rel (0) target = $region33
    $region32: #{tpu_custom_call.1} parent=1 // pred_region
      %78 = dma.done [#allocation6], 2048
    $region33: #{tpu_custom_call.1} parent=1 // pred_fallthru
      _
    // Predicated region
    $region34: #{tpu_custom_call.1} parent=1 // pred_check
      _
    $region35: #{tpu_custom_call.1} parent=1 // pred_check_branch
      %80 = sbr.rel (0) target = $region37
    $region36: #{tpu_custom_call.1} parent=1 // pred_region
      %82 = dma.done [#allocation9], 2048
    $region37: #{tpu_custom_call.1} parent=1 // pred_fallthru
      _
    %v83 = vld [vmem:[#allocation2] sm:$0xff]
    %84 = vst [vmem:[#allocation11] sm:$0xff] %v83
    %v85 = vld [vmem:[#allocation5] sm:$0xff]
    %86 = vst [vmem:[#allocation11 + $0x8] sm:$0xff] %v85
    %v87 = vld [vmem:[#allocation2] sm:$0xff]
    %v88 = vld [vmem:[#allocation7] sm:$0xff]
    %v89 = vld [vmem:[#allocation7 + $0x8] sm:$0xff]
    %v90 = vld [vmem:[#allocation7 + $0x10] sm:$0xff]
    %v91 = vld [vmem:[#allocation7 + $0x18] sm:$0xff]
    %v92 = vld [vmem:[#allocation7 + $0x20] sm:$0xff]
    %v93 = vld [vmem:[#allocation7 + $0x28] sm:$0xff]
    %v94 = vld [vmem:[#allocation7 + $0x30] sm:$0xff]
    %v95 = vld [vmem:[#allocation7 + $0x38] sm:$0xff]
    %v96 = vld [vmem:[#allocation7 + $0x40] sm:$0xff]
    %v97 = vld [vmem:[#allocation7 + $0x48] sm:$0xff]
    %v98 = vld [vmem:[#allocation7 + $0x50] sm:$0xff]
    %v99 = vld [vmem:[#allocation7 + $0x58] sm:$0xff]
    %v100 = vld [vmem:[#allocation7 + $0x60] sm:$0xff]
    %v101 = vld [vmem:[#allocation7 + $0x68] sm:$0xff]
    %v102 = vld [vmem:[#allocation7 + $0x70] sm:$0xff]
    %v103 = vld [vmem:[#allocation7 + $0x78] sm:$0xff]
    %v104 = vld [vmem:[#allocation5] sm:$0xff]
    %v105 = vld [vmem:[#allocation8] sm:$0xff]
    %v106 = vld [vmem:[#allocation8 + $0x8] sm:$0xff]
    %v107 = vld [vmem:[#allocation8 + $0x10] sm:$0xff]
    %v108 = vld [vmem:[#allocation8 + $0x18] sm:$0xff]
    %v109 = vld [vmem:[#allocation8 + $0x20] sm:$0xff]
    %v110 = vld [vmem:[#allocation8 + $0x28] sm:$0xff]
    %v111 = vld [vmem:[#allocation8 + $0x30] sm:$0xff]
    %v112 = vld [vmem:[#allocation8 + $0x38] sm:$0xff]
    %v113 = vld [vmem:[#allocation8 + $0x40] sm:$0xff]
    %v114 = vld [vmem:[#allocation8 + $0x48] sm:$0xff]
    %v115 = vld [vmem:[#allocation8 + $0x50] sm:$0xff]
    %v116 = vld [vmem:[#allocation8 + $0x58] sm:$0xff]
    %v117 = vld [vmem:[#allocation8 + $0x60] sm:$0xff]
    %v118 = vld [vmem:[#allocation8 + $0x68] sm:$0xff]
    %v119 = vld [vmem:[#allocation8 + $0x70] sm:$0xff]
    %v120 = vld [vmem:[#allocation8 + $0x78] sm:$0xff]
    %121 = vmatpush.xpose.msra.mxu0 %v120
    %122 = vmatpush.xpose.msra.mxu0 %v119
    %123 = vmatpush.xpose.msra.mxu0 %v118
    %124 = vmatpush.xpose.msra.mxu0 %v117
    %125 = vmatpush.xpose.msra.mxu0 %v116
    %126 = vmatpush.xpose.msra.mxu0 %v115
    %127 = vmatpush.xpose.msra.mxu0 %v114
    %128 = vmatpush.xpose.msra.mxu0 %v113
    %129 = vmatpush.xpose.msra.mxu0 %v112
    %130 = vmatpush.xpose.msra.mxu0 %v111
    %131 = vmatpush.xpose.msra.mxu0 %v110
    %132 = vmatpush.xpose.msra.mxu0 %v109
    %133 = vmatpush.xpose.msra.mxu0 %v108
    %134 = vmatpush.xpose.msra.mxu0 %v107
    %135 = vmatpush.xpose.msra.mxu0 %v106
    %136 = vmatpush.xpose.msra.mxu0 %v105
    %137 = vmatmul.f32.gmra.mxu0 %v104
    %v138 = vpop.f32.mrf.mxu0
    %v139 = vadd.f32 0.0, %v138
    %140 = vdwg.mxu0
    %141 = vmatpush.xpose.msra.mxu0 %v103
    %142 = vmatpush.xpose.msra.mxu0 %v102
    %143 = vmatpush.xpose.msra.mxu0 %v101
    %144 = vmatpush.xpose.msra.mxu0 %v100
    %145 = vmatpush.xpose.msra.mxu0 %v99
    %146 = vmatpush.xpose.msra.mxu0 %v98
    %147 = vmatpush.xpose.msra.mxu0 %v97
    %148 = vmatpush.xpose.msra.mxu0 %v96
    %149 = vmatpush.xpose.msra.mxu0 %v95
    %150 = vmatpush.xpose.msra.mxu0 %v94
    %151 = vmatpush.xpose.msra.mxu0 %v93
    %152 = vmatpush.xpose.msra.mxu0 %v92
    %153 = vmatpush.xpose.msra.mxu0 %v91
    %154 = vmatpush.xpose.msra.mxu0 %v90
    %155 = vmatpush.xpose.msra.mxu0 %v89
    %156 = vmatpush.xpose.msra.mxu0 %v88
    %157 = vmatmul.f32.gmra.mxu0 %v87
    %v158 = vpop.f32.mrf.mxu0
    %v159 = vadd.f32 %v139, %v158
    %160 = vdwg.mxu0
    %v161 = vld [vmem:[%s4] sm:$0x1]
    %v163 = vperm.slane %v161, 0
    %v165 = vadd.f32 %v159, %v163
    %vm166 = vcmask 64512
    %167 = vst.msk [vmem:[#allocation10] sm:$0xff] %vm166, %v165
    // Predicated region
    $region38: #{tpu_custom_call.1} parent=1 // pred_check
      _
    $region39: #{tpu_custom_call.1} parent=1 // pred_check_branch
      %169 = sbr.rel (0) target = $region41
    $region40: #{tpu_custom_call.1} parent=1 // pred_region
      %171 = vsyncadd [#allocation4], 0
      %s173 = sshll.u32 [#allocation10], 4
      %s174 = int_to_ptr.vmem [resolvable:$true] %s173
      %s175 = sshll.u32 %s5, 4
      %s176 = int_to_ptr.hbm [resolvable:$true] %s175
      %178 = dma.vmem_to_hbm [thread:$0]  %s174, 128, %s176, [#allocation4]
    $region41: #{tpu_custom_call.1} parent=1 // pred_fallthru
      _
    // Predicated region
    $region42: #{tpu_custom_call.1} parent=1 // pred_check
      _
    $region43: #{tpu_custom_call.1} parent=1 // pred_check_branch
      %180 = sbr.rel (0) target = $region45
    $region44: #{tpu_custom_call.1} parent=1 // pred_region
      %182 = vsyncadd [#allocation12], 0
      %s184 = sshll.u32 [#allocation11], 4
      %s185 = int_to_ptr.vmem [resolvable:$true] %s184
      %s186 = sshll.u32 %s6, 4
      %s187 = int_to_ptr.hbm [resolvable:$true] %s186
      %189 = dma.vmem_to_hbm [thread:$0]  %s185, 256, %s187, [#allocation12]
    $region45: #{tpu_custom_call.1} parent=1 // pred_fallthru
      _
    // Predicated region
    $region46: #{tpu_custom_call.1} parent=1 // pred_check
      _
    $region47: #{tpu_custom_call.1} parent=1 // pred_check_branch
      %191 = sbr.rel (0) target = $region49
    $region48: #{tpu_custom_call.1} parent=1 // pred_region
      %193 = dma.done [#allocation4], 128
    $region49: #{tpu_custom_call.1} parent=1 // pred_fallthru
      _
    // Predicated region
    $region50: #{tpu_custom_call.1} parent=1 // pred_check
      _
    $region51: #{tpu_custom_call.1} parent=1 // pred_check_branch
      %195 = sbr.rel (0) target = $region53
    $region52: #{tpu_custom_call.1} parent=1 // pred_region
      %197 = dma.done [#allocation12], 256
    $region53: #{tpu_custom_call.1} parent=1 // pred_fallthru
      _
    %198 = vsyncpa [#allocation3], 1
    %199 = vsyncpa [#allocation6], 1
    %200 = vsyncpa [#allocation9], 1
    %201 = vsyncpa [#allocation4], 1
    %202 = vsyncpa [#allocation12], 1

</llo_original>
